<compile_context>
chip_gen: v7x
topology: tpu7x:2x2x1
jax: 0.10.0
libtpu: 0.0.40
codegen_flags: <defaults>
</compile_context>

<pallas_src>
import functools

import jax
import jax.numpy as jnp
from jax.experimental import pallas as pl
from jax.experimental.pallas import tpu as pltpu

# Matches torch.finfo(torch.float32).eps (PyTorch default dtype).
EPS = float(jnp.finfo(jnp.float32).eps)


def _cdiv(a, b):
    return (a + b - 1) // b


# ----------------------------------------------------------------------------
# Path A: whole (N, K) row(s) per block — exact two-pass variance.
# ----------------------------------------------------------------------------
def _gln_onepass_kernel(y_ref, gamma_ref, beta_ref, o_ref):
    yf = y_ref[...].astype(jnp.float32)                       # (TB, N, K)
    inv_count = 1.0 / float(y_ref.shape[1] * y_ref.shape[2])  # static literal
    mean = jnp.sum(yf, axis=(1, 2), keepdims=True) * inv_count
    centered = yf - mean
    var = jnp.sum(centered * centered, axis=(1, 2), keepdims=True) * inv_count
    scale = gamma_ref[...].astype(jnp.float32) * jax.lax.rsqrt(var + EPS)
    o_ref[...] = (centered * scale + beta_ref[...].astype(jnp.float32)).astype(
        o_ref.dtype
    )


# ----------------------------------------------------------------------------
# Path B, pass 1: accumulate per-row s1 / s2 across K tiles, finalize to
# (mean, rstd). Accumulators live in the resident output blocks (same block
# index across the "arbitrary" K axis).
# Note: one-pass E[x^2]-E[x]^2 in f32; clamped at 0 against cancellation.
# ----------------------------------------------------------------------------
def _gln_stats_kernel(y_ref, mean_ref, rstd_ref, *, tk, k_total, count):
    k = pl.program_id(1)

    @pl.when(k == 0)
    def _():
        mean_ref[...] = jnp.zeros_like(mean_ref)   # running s1
        rstd_ref[...] = jnp.zeros_like(rstd_ref)   # running s2

    yf = y_ref[...].astype(jnp.float32)            # (TB, N, TK)
    # Mask padded columns of the last K tile so they don't pollute the sums.
    col = jax.lax.broadcasted_iota(jnp.int32, yf.shape, 2) + k * tk
    yf = jnp.where(col < k_total, yf, 0.0)

    mean_ref[...] += jnp.sum(yf, axis=(1, 2), keepdims=True)
    rstd_ref[...] += jnp.sum(yf * yf, axis=(1, 2), keepdims=True)

    @pl.when(k == pl.num_programs(1) - 1)
    def _():
        inv_count = 1.0 / float(count)             # full N*K, not tile size
        m = mean_ref[...] * inv_count
        v = jnp.maximum(rstd_ref[...] * inv_count - m * m, 0.0)
        mean_ref[...] = m
        rstd_ref[...] = jax.lax.rsqrt(v + EPS)


# ----------------------------------------------------------------------------
# Path B, pass 2: re-stream K tiles and apply the fused affine.
# ----------------------------------------------------------------------------
def _gln_apply_kernel(y_ref, mean_ref, rstd_ref, gamma_ref, beta_ref, o_ref):
    yf = y_ref[...].astype(jnp.float32)                           # (TB, N, TK)
    scale = gamma_ref[...].astype(jnp.float32) * rstd_ref[...]    # (TB, N, 1)
    shift = beta_ref[...].astype(jnp.float32) - mean_ref[...] * scale
    o_ref[...] = (yf * scale + shift).astype(o_ref.dtype)


# ----------------------------------------------------------------------------
# Wrapper
# ----------------------------------------------------------------------------
def _vmem_budget():
    """(target block bytes, vmem_limit cap) — conservative v7x defaults,
    bumped on 128 MiB-VMEM chips (v5e / v6e)."""
    cap = 64 << 20
    try:
        info = pltpu.get_tpu_info()
        cap = int(getattr(info, "vmem_capacity_bytes", cap))
    except Exception:
        pass
    if cap >= (128 << 20):
        return 8 << 20, 96 << 20
    return 4 << 20, 48 << 20


def global_layer_norm(y, gamma, beta, *, force_two_pass=False):
    """y: [M, N, K]; gamma, beta: [1, N, 1]. Returns [M, N, K]."""
    M, N, K = y.shape
    target_block, vmem_cap = _vmem_budget()

    row_f32 = N * K * 4  # per-row working footprint in f32
    # ~6x a block: 2x in + 2x out (double-buffered) + f32 cast/centered temps.
    fits_onepass = (6 * row_f32 + (2 << 20)) <= vmem_cap and not force_two_pass

    if fits_onepass:
        tb = max(1, min(M, target_block // max(row_f32, 1)))
        if M >= 2:
            tb = min(tb, _cdiv(M, 2))  # keep >= 2 grid steps (v7x: 2 TCs)
        grid_m = _cdiv(M, tb)          # cdiv grid: padded last block is fine
        block_f32 = tb * row_f32
        vmem_limit = int(min(max(6 * block_f32 + (2 << 20), 32 << 20), vmem_cap))

        return pl.pallas_call(
            _gln_onepass_kernel,
            out_shape=jax.ShapeDtypeStruct((M, N, K), y.dtype),
            grid_spec=pltpu.PrefetchScalarGridSpec(
                num_scalar_prefetch=0,
                grid=(grid_m,),
                in_specs=[
                    pl.BlockSpec((tb, N, K), lambda m: (m, 0, 0)),
                    pl.BlockSpec((1, N, 1), lambda m: (0, 0, 0)),
                    pl.BlockSpec((1, N, 1), lambda m: (0, 0, 0)),
                ],
                out_specs=pl.BlockSpec((tb, N, K), lambda m: (m, 0, 0)),
            ),
            compiler_params=pltpu.CompilerParams(
                dimension_semantics=("parallel",),
                vmem_limit_bytes=vmem_limit,
            ),
        )(y, gamma, beta)

    # ----- Path B: K-tiled two-pass (long rows or forced for testing) -------
    tb = 1
    tk = max(128, (target_block // max(N * 4, 1)) // 128 * 128)  # lane-dense
    tk = min(tk, _cdiv(K, 128) * 128)
    grid_k = _cdiv(K, tk)
    grid_m = _cdiv(M, tb)
    block_f32 = tb * N * tk * 4
    vmem_limit = int(min(max(6 * block_f32 + (2 << 20), 32 << 20), vmem_cap))

    stats_kernel = functools.partial(
        _gln_stats_kernel, tk=tk, k_total=K, count=N * K
    )
    mean, rstd = pl.pallas_call(
        stats_kernel,
        out_shape=(
            jax.ShapeDtypeStruct((M, 1, 1), jnp.float32),
            jax.ShapeDtypeStruct((M, 1, 1), jnp.float32),
        ),
        grid_spec=pltpu.PrefetchScalarGridSpec(
            num_scalar_prefetch=0,
            grid=(grid_m, grid_k),
            in_specs=[pl.BlockSpec((tb, N, tk), lambda m, k: (m, 0, k))],
            out_specs=[
                pl.BlockSpec((tb, 1, 1), lambda m, k: (m, 0, 0)),
                pl.BlockSpec((tb, 1, 1), lambda m, k: (m, 0, 0)),
            ],
        ),
        compiler_params=pltpu.CompilerParams(
            dimension_semantics=("parallel", "arbitrary"),
            vmem_limit_bytes=vmem_limit,
        ),
    )(y)

    return pl.pallas_call(
        _gln_apply_kernel,
        out_shape=jax.ShapeDtypeStruct((M, N, K), y.dtype),
        grid_spec=pltpu.PrefetchScalarGridSpec(
            num_scalar_prefetch=0,
            grid=(grid_m, grid_k),
            in_specs=[
                pl.BlockSpec((tb, N, tk), lambda m, k: (m, 0, k)),
                pl.BlockSpec((tb, 1, 1), lambda m, k: (m, 0, 0)),
                pl.BlockSpec((tb, 1, 1), lambda m, k: (m, 0, 0)),
                pl.BlockSpec((1, N, 1), lambda m, k: (0, 0, 0)),
                pl.BlockSpec((1, N, 1), lambda m, k: (0, 0, 0)),
            ],
            out_specs=pl.BlockSpec((tb, N, tk), lambda m, k: (m, 0, k)),
        ),
        compiler_params=pltpu.CompilerParams(
            dimension_semantics=("parallel", "parallel"),
            vmem_limit_bytes=vmem_limit,
        ),
    )(y, mean, rstd, gamma, beta)


if __name__ == "__main__":
    key = jax.random.PRNGKey(0)
    M, N, K = 2, 4, 16  # batch, channels, length
    y = jax.random.normal(key, (M, N, K), dtype=jnp.float32)

    # Deterministic params, same as reset_parameters(): gamma=1, beta=0.
    gamma = jnp.ones((1, N, 1), dtype=jnp.float32)
    beta = jnp.zeros((1, N, 1), dtype=jnp.float32)

    # Plain-JAX reference (mirrors the PyTorch formulation).
    mean = jnp.mean(y, axis=(1, 2), keepdims=True)
    var = jnp.mean((y - mean) ** 2, axis=(1, 2), keepdims=True)
    ref = gamma * (y - mean) / jnp.sqrt(var + EPS) + beta

    # Path A (single-pass, row-resident).
    out_a = jax.block_until_ready(global_layer_norm(y, gamma, beta))
    assert jnp.allclose(out_a, ref, atol=1e-5, rtol=1e-5), "Path A mismatch"

    # Path B (K-tiled two-pass), forced at small shape to exercise masking.
    out_b = jax.block_until_ready(
        global_layer_norm(y, gamma, beta, force_two_pass=True)
    )
    assert jnp.allclose(out_b, ref, atol=1e-4, rtol=1e-4), "Path B mismatch"

    print("KERNEL_OK")
</pallas_src>

<mosaic_0001>
module attributes {stable_mosaic.version = 11 : i64} {
  func.func @_gln_onepass_kernel(%arg0: i32, %arg1: memref<1x4x16xf32, #tpu.memory_space<vmem>>, %arg2: memref<1x4x1xf32, #tpu.memory_space<vmem>>, %arg3: memref<1x4x1xf32, #tpu.memory_space<vmem>>, %arg4: memref<1x4x16xf32, #tpu.memory_space<vmem>>) attributes {dimension_semantics = [#tpu.dimension_semantics<parallel>], iteration_bounds = array<i64: 2>, scalar_prefetch = 0 : i64, scratch_operands = 0 : i64, tpu.core_type = #tpu.core_type<tc>, window_params = [{transform_indices = @transform_0, window_bounds = array<i64: 1, 4, 16>}, {pipeline_mode = #tpu.pipeline_mode<synchronous>, transform_indices = @transform_1, window_bounds = array<i64: 1, 4, 1>}, {pipeline_mode = #tpu.pipeline_mode<synchronous>, transform_indices = @transform_2, window_bounds = array<i64: 1, 4, 1>}, {transform_indices = @transform_3, window_bounds = array<i64: 1, 4, 16>}]} {
    %c0 = arith.constant 0 : index
    %c0_0 = arith.constant 0 : index
    %c0_1 = arith.constant 0 : index
    %0 = vector.load %arg1[%c0, %c0_0, %c0_1] : memref<1x4x16xf32, #tpu.memory_space<vmem>>, vector<1x4x16xf32>
    %cst = arith.constant dense<0.000000e+00> : vector<1xf32>
    %1 = vector.multi_reduction <add>, %0, %cst [1, 2] : vector<1x4x16xf32> to vector<1xf32>
    %2 = vector.shape_cast %1 : vector<1xf32> to vector<1x1x1xf32>
    %cst_2 = arith.constant 1.562500e-02 : f32
    %3 = vector.broadcast %cst_2 : f32 to vector<1x1x1xf32>
    %4 = arith.mulf %2, %3 : vector<1x1x1xf32>
    %5 = vector.broadcast %4 : vector<1x1x1xf32> to vector<1x4x16xf32>
    %6 = arith.subf %0, %5 : vector<1x4x16xf32>
    %7 = arith.mulf %6, %6 : vector<1x4x16xf32>
    %cst_3 = arith.constant dense<0.000000e+00> : vector<1xf32>
    %8 = vector.multi_reduction <add>, %7, %cst_3 [1, 2] : vector<1x4x16xf32> to vector<1xf32>
    %9 = vector.shape_cast %8 : vector<1xf32> to vector<1x1x1xf32>
    %cst_4 = arith.constant 1.562500e-02 : f32
    %10 = vector.broadcast %cst_4 : f32 to vector<1x1x1xf32>
    %11 = arith.mulf %9, %10 : vector<1x1x1xf32>
    %c0_5 = arith.constant 0 : index
    %c0_6 = arith.constant 0 : index
    %c0_7 = arith.constant 0 : index
    %12 = vector.load %arg2[%c0_5, %c0_6, %c0_7] : memref<1x4x1xf32, #tpu.memory_space<vmem>>, vector<1x4x1xf32>
    %cst_8 = arith.constant 1.1920929E-7 : f32
    %13 = vector.broadcast %cst_8 : f32 to vector<1x1x1xf32>
    %14 = arith.addf %11, %13 : vector<1x1x1xf32>
    %15 = math.rsqrt %14 : vector<1x1x1xf32>
    %16 = vector.broadcast %15 : vector<1x1x1xf32> to vector<1x4x1xf32>
    %17 = arith.mulf %12, %16 : vector<1x4x1xf32>
    %18 = vector.broadcast %17 : vector<1x4x1xf32> to vector<1x4x16xf32>
    %19 = arith.mulf %6, %18 : vector<1x4x16xf32>
    %c0_9 = arith.constant 0 : index
    %c0_10 = arith.constant 0 : index
    %c0_11 = arith.constant 0 : index
    %20 = vector.load %arg3[%c0_9, %c0_10, %c0_11] : memref<1x4x1xf32, #tpu.memory_space<vmem>>, vector<1x4x1xf32>
    %21 = vector.broadcast %20 : vector<1x4x1xf32> to vector<1x4x16xf32>
    %22 = arith.addf %19, %21 : vector<1x4x16xf32>
    %c0_12 = arith.constant 0 : index
    %c0_13 = arith.constant 0 : index
    %c0_14 = arith.constant 0 : index
    %23 = vector.load %arg4[%c0_12, %c0_13, %c0_14] : memref<1x4x16xf32, #tpu.memory_space<vmem>>, vector<1x4x16xf32>
    tpu.vector_store %arg4[%c0_12, %c0_13, %c0_14], %22 {strides = array<i32>} : memref<1x4x16xf32, #tpu.memory_space<vmem>>, vector<1x4x16xf32>,
    return
  }
  func.func @transform_0(%arg0: i32) -> (i32, i32, i32) {
    %c0_i32 = arith.constant 0 : i32
    %c0_i32_0 = arith.constant 0 : i32
    %c0_i32_1 = arith.constant 0 : i32
    return %arg0, %c0_i32, %c0_i32_0 : i32, i32, i32
  }
  func.func @transform_1(%arg0: i32) -> (i32, i32, i32) {
    %c0_i32 = arith.constant 0 : i32
    %c0_i32_0 = arith.constant 0 : i32
    %c0_i32_1 = arith.constant 0 : i32
    %c0_i32_2 = arith.constant 0 : i32
    return %c0_i32, %c0_i32_0, %c0_i32_1 : i32, i32, i32
  }
  func.func @transform_2(%arg0: i32) -> (i32, i32, i32) {
    %c0_i32 = arith.constant 0 : i32
    %c0_i32_0 = arith.constant 0 : i32
    %c0_i32_1 = arith.constant 0 : i32
    %c0_i32_2 = arith.constant 0 : i32
    return %c0_i32, %c0_i32_0, %c0_i32_1 : i32, i32, i32
  }
  func.func @transform_3(%arg0: i32) -> (i32, i32, i32) {
    %c0_i32 = arith.constant 0 : i32
    %c0_i32_0 = arith.constant 0 : i32
    %c0_i32_1 = arith.constant 0 : i32
    return %arg0, %c0_i32, %c0_i32_0 : i32, i32, i32
  }
}

</mosaic_0001>

<llo_original>
// kernel: tpu_custom_call.1
$region0: #{tpu_custom_call.1}
  #allocation0 [shape = 'u32[]', space=smem, size = 0x4, offset = 0x4, fixed_abs, tag = 'smem constant byte address 0x4 - core index']
  #allocation1 [shape = 'u32[144,128]{1,0:T(1,128)}', space=vmem, size = 0x12000, scoped, tag = 'internal scratch']
  %s0 = inlined_call_operand.vmem [shape: f32[2,4,16], index: 0, kind: input, shape index: {}]
  %s1 = inlined_call_operand.vmem [shape: f32[1,4,1], index: 1, kind: input, shape index: {}]
  %s2 = inlined_call_operand.vmem [shape: f32[1,4,1], index: 2, kind: input, shape index: {}]
  %s3 = inlined_call_operand.hbm [shape: f32[2,4,16], index: 3, kind: output, shape index: {}]
  %s4 = sld [smem:[#allocation0]]
  $region45: #{tpu_custom_call.1} parent=0
    _
  %s6 = ssub.s32 1, %s4
  %s7 = scalar_select 0, %s6, %s4
  $region1: #{tpu_custom_call.1} parent=0
    #allocation2 [shape = 'u8[4096]{0}', space=vmem, size = 0x1000, scoped, tag = 'output window, operand 0']
    #allocation3 [shape = 's32[2]{0}', space=sflag, size = 0x8, scoped, tag = 'scoped memory for tpu_custom_call.1']
    %8 = vsyncpa [#allocation3], 0
    %s9 = scalar_lea.sflag [#allocation3], 1
    %10 = vsyncpa %s9, 0
    loop: start=0, step=1, limit=4
    $region2: #{tpu_custom_call.1} parent=1 // loop_pre_header
      _
    $region3: #{tpu_custom_call.1} parent=1 // loop_header
      %s12 = sphi 0, %s16
      %p13 = scmp.ge.s32.totalorder %s12, 4
      %s22 = sphi 0, %s24
      %s25 = sphi 0, %s22
      %s26 = sphi 0, %s25
      %s42 = sphi 0, %s26
      %s46 = sphi 0, %s46
      %s48 = sphi 0, %s46
      %s49 = sphi 0, %s48
      %s63 = sphi 0, %s49
      %s67 = sphi 0, %s67
      %s69 = sphi 0, %s67
      %s70 = sphi 0, %s69
      %s84 = sphi 0, %s70
      %s90 = sphi 0, %s92
      %s93 = sphi 0, %s90
      %s94 = sphi 0, %s93
      %s110 = sphi 0, %s94
    $region4: #{tpu_custom_call.1} parent=1 // loop_header_branch
      %15 = sbr.rel (%p13) target = $region8
    $region5: #{tpu_custom_call.1} parent=1 // loop_body
      %s17 = ssub.s32 %s12, 1
      %s18 = ssub.s32 %s12, 2
      %s19 = sadd.s32 %s12, 1
      %s20 = ssub.s32 %s12, %s19
      %p21 = scmp.eq.s32.totalorder %s20, 0
      %s23 = sadd.s32 %s22, 1
      %s24 = scalar_select %p21, %s22, %s23
      %p27 = pneg %p21
      %p28 = scmp.eq.s32.totalorder %s12, 1
      %p29 = por %p27, %p28
      %p30 = scmp.ne.s32.totalorder %s22, %s25
      %p31 = scmp.eq.s32.totalorder %s12, 0
      %p32 = por %p30, %p31
      %p33 = scmp.ne.s32.totalorder %s22, %s25
      %p34 = scmp.eq.s32.totalorder %s17, 1
      %p35 = por %p33, %p34
      %p36 = scmp.ne.s32.totalorder %s25, %s26
      %p37 = scmp.eq.s32.totalorder %s17, 0
      %p38 = por %p36, %p37
      %p39 = scmp.ne.s32.totalorder %s25, %s26
      %p40 = scmp.eq.s32.totalorder %s18, 1
      %p41 = por %p39, %p40
      %p43 = scmp.ne.s32.totalorder %s26, %s42
      %p44 = scmp.eq.s32.totalorder %s18, 0
      %p45 = por %p43, %p44
      %s47 = sadd.s32 %s46, 1
      %p50 = scmp.eq.s32.totalorder %s12, 1
      %p51 = scmp.ne.s32.totalorder %s46, %s48
      %p52 = scmp.eq.s32.totalorder %s12, 0
      %p53 = por %p51, %p52
      %p54 = scmp.ne.s32.totalorder %s46, %s48
      %p55 = scmp.eq.s32.totalorder %s17, 1
      %p56 = por %p54, %p55
      %p57 = scmp.ne.s32.totalorder %s48, %s49
      %p58 = scmp.eq.s32.totalorder %s17, 0
      %p59 = por %p57, %p58
      %p60 = scmp.ne.s32.totalorder %s48, %s49
      %p61 = scmp.eq.s32.totalorder %s18, 1
      %p62 = por %p60, %p61
      %p64 = scmp.ne.s32.totalorder %s49, %s63
      %p65 = scmp.eq.s32.totalorder %s18, 0
      %p66 = por %p64, %p65
      %s68 = sadd.s32 %s67, 1
      %p71 = scmp.eq.s32.totalorder %s12, 1
      %p72 = scmp.ne.s32.totalorder %s67, %s69
      %p73 = scmp.eq.s32.totalorder %s12, 0
      %p74 = por %p72, %p73
      %p75 = scmp.ne.s32.totalorder %s67, %s69
      %p76 = scmp.eq.s32.totalorder %s17, 1
      %p77 = por %p75, %p76
      %p78 = scmp.ne.s32.totalorder %s69, %s70
      %p79 = scmp.eq.s32.totalorder %s17, 0
      %p80 = por %p78, %p79
      %p81 = scmp.ne.s32.totalorder %s69, %s70
      %p82 = scmp.eq.s32.totalorder %s18, 1
      %p83 = por %p81, %p82
      %p85 = scmp.ne.s32.totalorder %s70, %s84
      %p86 = scmp.eq.s32.totalorder %s18, 0
      %p87 = por %p85, %p86
      %s88 = ssub.s32 %s12, %s19
      %p89 = scmp.eq.s32.totalorder %s88, 0
      %s91 = sadd.s32 %s90, 1
      %s92 = scalar_select %p89, %s90, %s91
      %p95 = pneg %p89
      %p96 = scmp.eq.s32.totalorder %s12, 1
      %p97 = por %p95, %p96
      %p98 = scmp.ne.s32.totalorder %s90, %s93
      %p99 = scmp.eq.s32.totalorder %s12, 0
      %p100 = por %p98, %p99
      %p101 = scmp.ne.s32.totalorder %s90, %s93
      %p102 = scmp.eq.s32.totalorder %s17, 1
      %p103 = por %p101, %p102
      %p104 = scmp.ne.s32.totalorder %s93, %s94
      %p105 = scmp.eq.s32.totalorder %s17, 0
      %p106 = por %p104, %p105
      %p107 = scmp.ne.s32.totalorder %s93, %s94
      %p108 = scmp.eq.s32.totalorder %s18, 1
      %p109 = por %p107, %p108
      %p111 = scmp.ne.s32.totalorder %s94, %s110
      %p112 = scmp.eq.s32.totalorder %s18, 0
      %p113 = por %p111, %p112
      %p114 = scmp.le.s32.totalorder 1, %s12
      %p115 = scmp.lt.s32.totalorder %s12, 3
      %p116 = pnand %p114, %p115
      %p117 = pneg %p116
      // Predicated region
      $region9: #{tpu_custom_call.1} parent=5 // pred_check
        _
      $region10: #{tpu_custom_call.1} parent=5 // pred_check_branch
        %119 = sbr.rel (%p116) target = $region12
      $region11: #{tpu_custom_call.1} parent=5 // pred_region
        %s120 = ssub.s32 %s12, 1
        // Predicated region
        $region13: #{tpu_custom_call.1} parent=11 // pred_check
          %p121 = pneg %p59
        $region14: #{tpu_custom_call.1} parent=11 // pred_check_branch
          %123 = sbr.rel (%p121) target = $region16
        $region15: #{tpu_custom_call.1} parent=11 // pred_region
          _
        $region16: #{tpu_custom_call.1} parent=11 // pred_fallthru
          _
        // Predicated region
        $region17: #{tpu_custom_call.1} parent=11 // pred_check
          %p124 = pneg %p80
        $region18: #{tpu_custom_call.1} parent=11 // pred_check_branch
          %126 = sbr.rel (%p124) target = $region20
        $region19: #{tpu_custom_call.1} parent=11 // pred_region
          _
        $region20: #{tpu_custom_call.1} parent=11 // pred_fallthru
          _
      $region12: #{tpu_custom_call.1} parent=5 // pred_fallthru
        _
      %p127 = scmp.lt.s32.totalorder %s12, 2
      // Predicated region
      $region21: #{tpu_custom_call.1} parent=5 // pred_check
        %p128 = pneg %p127
      $region22: #{tpu_custom_call.1} parent=5 // pred_check_branch
        %130 = sbr.rel (%p128) target = $region24
      $region23: #{tpu_custom_call.1} parent=5 // pred_region
        // Predicated region
        $region25: #{tpu_custom_call.1} parent=23 // pred_check
          %p131 = pneg %p32
        $region26: #{tpu_custom_call.1} parent=23 // pred_check_branch
          %133 = sbr.rel (%p131) target = $region28
        $region27: #{tpu_custom_call.1} parent=23 // pred_region
          %p134 = scmp.lt.s32.totalorder %s12, 1
          %s135 = scalar_select %p134, %s12, 1
          %s136 = smul.addr %s135, 4
          %s137 = scalar_lea.vmem %s0, %s136
        $region28: #{tpu_custom_call.1} parent=23 // pred_fallthru
          _
      $region24: #{tpu_custom_call.1} parent=5 // pred_fallthru
        _
      %p138 = scmp.le.s32.totalorder 1, %s12
      %p139 = scmp.lt.s32.totalorder %s12, 3
      %p140 = pnand %p138, %p139
      %p141 = pneg %p140
      // Predicated region
      $region29: #{tpu_custom_call.1} parent=5 // pred_check
        _
      $region30: #{tpu_custom_call.1} parent=5 // pred_check_branch
        %143 = sbr.rel (%p140) target = $region32
      $region31: #{tpu_custom_call.1} parent=5 // pred_region
        %s144 = ssub.s32 %s12, 1
        %p145 = scmp.lt.s32.totalorder %s17, 1
        %s146 = scalar_select %p145, %s17, 1
        %s147 = smul.addr %s146, 4
        %s148 = scalar_lea.vmem %s0, %s147
        %p149 = pneg %p38
        %p150 = pneg %p35
        %p151 = pneg %p59
        %p152 = pneg %p56
        %p153 = pneg %p80
        %p154 = pneg %p77
        %p155 = pneg %p106
        %p156 = pneg %p103
        %s157 = sand.u32 %s93, 1
        %s158 = scalar_lea.sflag [#allocation3], %s157
        %s159 = sand.u32 %s93, 1
        %s160 = smul.addr %s159, 4
        %s161 = scalar_lea.vmem [#allocation2], %s160
        %p162 = scmp.lt.s32.totalorder %s17, 1
        %s163 = scalar_select %p162, %s17, 1
        %s164 = smul.addr %s163, 4
        %s165 = scalar_lea.vmem %s0, %s164
        %v166 = vld [vmem:[%s165] sm:$0xf]
        %vm167 = vcmask 125952
        %v168 = vsel %vm167, %v166, 0.0
        %169 = vadd.xlane.f32.xlu0 %v168
        %v170 = vpop.xlane.xlu0 %169
        %v171 = vrot.slane %v170, 4
        %v172 = vadd.f32 %v170, %v171
        %v173 = vrot.slane %v172, 2
        %v174 = vadd.f32 %v172, %v173
        %v175 = vrot.slane %v174, 1
        %v176 = vadd.f32 %v174, %v175
        %v177 = vmul.f32 %v176, 0.015625
        %v178 = vsub.f32 %v166, %v177
        %v179 = vmul.f32 %v178, %v178
        %v180 = vsel %vm167, %v179, 0.0
        %181 = vadd.xlane.f32.xlu0 %v180
        %v182 = vpop.xlane.xlu0 %181
        %v183 = vrot.slane %v182, 4
        %v184 = vadd.f32 %v182, %v183
        %v185 = vrot.slane %v184, 2
        %v186 = vadd.f32 %v184, %v185
        %v187 = vrot.slane %v186, 1
        %v188 = vadd.f32 %v186, %v187
        %v189 = vmul.f32 %v188, 0.015625
        %v190 = vld [vmem:[%s1] sm:$0xf]
        %v191 = vadd.f32 %v189, 1.1920929e-07
        %v192 = vrsqrt.pop %v191
        %v193 = vmul.f32 %v190, %v192
        %195 = vset.pattern.permute.xlu0 0
        %196 = vperm.xlu0 %195, %v193
        %v197 = vpop.permute.xlu0 %196
        %v199 = vmul.f32 %v178, %v197
        %v200 = vld [vmem:[%s2] sm:$0xf]
        %202 = vset.pattern.permute.xlu0 0
        %203 = vperm.xlu0 %202, %v200
        %v204 = vpop.permute.xlu0 %203
        %v206 = vadd.f32 %v199, %v204
        %207 = vst.msk [vmem:[%s161] sm:$0xf] %vm167, %v206
        %s208 = sand.u32 %s93, 1
        %s209 = scalar_lea.sflag [#allocation3], %s208
        %s210 = sand.u32 %s93, 1
        %s211 = smul.addr %s210, 4
        %s212 = scalar_lea.vmem [#allocation2], %s211
        // Predicated region
        $region33: #{tpu_custom_call.1} parent=31 // pred_check
          %p213 = pneg %p103
        $region34: #{tpu_custom_call.1} parent=31 // pred_check_branch
          %215 = sbr.rel (%p213) target = $region36
        $region35: #{tpu_custom_call.1} parent=31 // pred_region
          %s217 = ssub.s32 64, 64
          %218 = vsyncadd %s209, %s217
          %s219 = smul.addr %s17, 64
          %s220 = scalar_lea.hbm %s3, %s219
          %s222 = sshll.u32 %s212, 4
          %s223 = int_to_ptr.vmem [resolvable:$true] %s222
          %225 = dma.vmem_to_hbm [thread:$0]  %s223, 64, %s220, %s209
        $region36: #{tpu_custom_call.1} parent=31 // pred_fallthru
          _
      $region32: #{tpu_custom_call.1} parent=5 // pred_fallthru
        _
      %p226 = scmp.le.s32.totalorder 2, %s12
      // Predicated region
      $region37: #{tpu_custom_call.1} parent=5 // pred_check
        %p227 = pneg %p226
      $region38: #{tpu_custom_call.1} parent=5 // pred_check_branch
        %229 = sbr.rel (%p227) target = $region40
      $region39: #{tpu_custom_call.1} parent=5 // pred_region
        %s230 = ssub.s32 %s12, 2
        // Predicated region
        $region41: #{tpu_custom_call.1} parent=39 // pred_check
          %p231 = pneg %p109
        $region42: #{tpu_custom_call.1} parent=39 // pred_check_branch
          %233 = sbr.rel (%p231) target = $region44
        $region43: #{tpu_custom_call.1} parent=39 // pred_region
          %s234 = sand.u32 %s94, 1
          %s235 = scalar_lea.sflag [#allocation3], %s234
          %s236 = sand.u32 %s94, 1
          %s237 = smul.addr %s236, 4
          %s238 = scalar_lea.vmem [#allocation2], %s237
          %239 = dma.done %s235, 64
        $region44: #{tpu_custom_call.1} parent=39 // pred_fallthru
          _
      $region40: #{tpu_custom_call.1} parent=5 // pred_fallthru
        _
    $region6: #{tpu_custom_call.1} parent=1 // loop_footer
      %s16 = sadd.s32 1, %s12
    $region7: #{tpu_custom_call.1} parent=1 // loop_footer_branch
      %11 = sbr.rel target = $region3
    $region8: #{tpu_custom_call.1} parent=1 // loop_exit
      _
    %240 = vsyncpa [#allocation3], 1
    %s241 = scalar_lea.sflag [#allocation3], 1
    %242 = vsyncpa %s241, 1

</llo_original>
